<compile_context>
chip_gen: v7x
topology: tpu7x:2x2x1
jax: 0.10.0
libtpu: 0.0.40
codegen_flags: <defaults>
</compile_context>

<pallas_src>
import functools

import jax
import jax.numpy as jnp
from jax.experimental import pallas as pl
from jax.experimental.pallas import tpu as pltpu


def _round_up(a, b):
    return (a + b - 1) // b * b


def _mlm_head_kernel(x_ref, wd_ref, bd_ref, gamma_ref, beta_ref, wp_ref,
                     o_ref, ln_ref):
    # x_ref:    [tm, H]   input row tile
    # wd_ref:   [H, H]    dense weight, PyTorch [out, in] layout
    # bd_ref:   [1, H]    dense bias
    # gamma_ref/beta_ref: [1, H] LayerNorm affine params
    # wp_ref:   [tv, H]   prediction weight tile, PyTorch [out, in] layout
    # o_ref:    [tm, tv]  output tile
    # ln_ref:   [tm, H]   VMEM scratch: LayerNorm output for this row tile

    @pl.when(pl.program_id(1) == 0)
    def _compute_ln():
        # dense: x @ Wd^T + b   (contract H of x with H_in of Wd; MXU
        # accumulates in f32, no operand upcast)
        h = jax.lax.dot_general(
            x_ref[...], wd_ref[...],
            dimension_numbers=(((1,), (1,)), ((), ())),
            preferred_element_type=jnp.float32,
        ) + bd_ref[...].astype(jnp.float32)

        # exact GELU (matches torch.nn.functional.gelu default) -- EUP path
        g = 0.5 * h * (1.0 + jax.lax.erf(h * jnp.float32(0.7071067811865476)))

        # LayerNorm over last dim, eps=1e-6, biased variance; stats in f32
        mean = jnp.mean(g, axis=-1, keepdims=True)
        centered = g - mean
        var = jnp.mean(centered * centered, axis=-1, keepdims=True)
        inv = jax.lax.rsqrt(var + jnp.float32(1e-6))
        ln = (centered * inv * gamma_ref[...].astype(jnp.float32)
              + beta_ref[...].astype(jnp.float32))
        ln_ref[...] = ln.astype(ln_ref.dtype)

    # vocab projection for this vocab tile: ln [tm,H] @ Wp^T -> [tm,tv] (no bias)
    o_ref[...] = jax.lax.dot_general(
        ln_ref[...], wp_ref[...],
        dimension_numbers=(((1,), (1,)), ((), ())),
        preferred_element_type=jnp.float32,
    ).astype(o_ref.dtype)


@functools.partial(jax.jit, static_argnames=("tm", "tv"))
def bert_only_mlm_head(sequence_output, params, *, tm=256, tv=2048):
    """sequence_output: [B, S, H] -> prediction_scores: [B, S, V]"""
    B, S, H = sequence_output.shape
    wd = params["dense_w"]      # [H, H], PyTorch layout [out, in]
    bd = params["dense_b"]      # [H]
    gamma = params["ln_w"]      # [H]
    beta = params["ln_b"]       # [H]
    wp = params["pred_w"]       # [V, H], PyTorch layout [out, in]
    V = wp.shape[0]

    M = B * S
    # Clamp tiles for small problems; keep sublane/lane alignment.
    tm_eff = min(tm, _round_up(M, 8))
    tv_eff = min(tv, _round_up(V, 128))
    M_pad = _round_up(M, tm_eff)
    V_pad = _round_up(V, tv_eff)

    x2d = sequence_output.reshape(M, H)
    if M_pad != M:
        x2d = jnp.pad(x2d, ((0, M_pad - M), (0, 0)))
    wp_p = wp if V_pad == V else jnp.pad(wp, ((0, V_pad - V), (0, 0)))

    bd2 = bd.reshape(1, H)
    gamma2 = gamma.reshape(1, H)
    beta2 = beta.reshape(1, H)

    grid = (M_pad // tm_eff, V_pad // tv_eff)

    out = pl.pallas_call(
        _mlm_head_kernel,
        out_shape=jax.ShapeDtypeStruct((M_pad, V_pad), sequence_output.dtype),
        grid_spec=pltpu.PrefetchScalarGridSpec(
            num_scalar_prefetch=0,
            grid=grid,
            in_specs=[
                pl.BlockSpec((tm_eff, H), lambda i, j: (i, 0)),   # x rows
                pl.BlockSpec((H, H), lambda i, j: (0, 0)),        # dense weight
                pl.BlockSpec((1, H), lambda i, j: (0, 0)),        # dense bias
                pl.BlockSpec((1, H), lambda i, j: (0, 0)),        # LN gamma
                pl.BlockSpec((1, H), lambda i, j: (0, 0)),        # LN beta
                pl.BlockSpec((tv_eff, H), lambda i, j: (j, 0)),   # pred weight tile
            ],
            out_specs=pl.BlockSpec((tm_eff, tv_eff), lambda i, j: (i, j)),
            scratch_shapes=[pltpu.VMEM((tm_eff, H), sequence_output.dtype)],
        ),
        compiler_params=pltpu.CompilerParams(
            # Row axis sharded across TensorCores (megacore); vocab axis carries
            # the LN scratch so it must stay "arbitrary" and innermost.
            dimension_semantics=("parallel", "arbitrary"),
            vmem_limit_bytes=48 * 1024 * 1024,
        ),
    )(x2d, wd, bd2, gamma2, beta2, wp_p)

    out = out[:M, :V]
    return out.reshape(B, S, V)


def _reference(sequence_output, params):
    x = sequence_output.astype(jnp.float32)
    h = x @ params["dense_w"].T.astype(jnp.float32) + params["dense_b"].astype(jnp.float32)
    g = 0.5 * h * (1.0 + jax.lax.erf(h / jnp.sqrt(2.0)))
    mean = jnp.mean(g, axis=-1, keepdims=True)
    var = jnp.mean((g - mean) ** 2, axis=-1, keepdims=True)
    ln = (g - mean) * jax.lax.rsqrt(var + 1e-6)
    ln = ln * params["ln_w"].astype(jnp.float32) + params["ln_b"].astype(jnp.float32)
    return ln @ params["pred_w"].T.astype(jnp.float32)


def _make_params(key, H, V):
    k0, k1, k2 = jax.random.split(key, 3)
    return {
        "dense_w": jax.random.normal(k0, (H, H), jnp.float32) * 0.02,
        "dense_b": jax.random.normal(k1, (H,), jnp.float32) * 0.02,
        "ln_w": jnp.ones((H,), jnp.float32),
        "ln_b": jnp.zeros((H,), jnp.float32),
        "pred_w": jax.random.normal(k2, (V, H), jnp.float32) * 0.02,
    }


if __name__ == "__main__":
    key = jax.random.PRNGKey(0)

    # Test 1: small config, single tile (hidden=128, vocab=256, batch=2, seq=8)
    B, S, H, V = 2, 8, 128, 256
    kp, kx, key = jax.random.split(key, 3)
    params = _make_params(kp, H, V)
    x = jax.random.normal(kx, (B, S, H), jnp.float32)

    out = jax.block_until_ready(bert_only_mlm_head(x, params))
    ref = _reference(x, params)
    assert out.shape == (B, S, V)
    assert jnp.allclose(out, ref, atol=1e-4, rtol=1e-4)

    # Test 2: multi-tile grid with row/vocab padding (exercises the LN scratch
    # reuse across vocab tiles and the padded tail tiles).
    B2, S2, H2, V2 = 2, 10, 128, 384
    kp2, kx2, key = jax.random.split(key, 3)
    params2 = _make_params(kp2, H2, V2)
    x2 = jax.random.normal(kx2, (B2, S2, H2), jnp.float32)

    out2 = jax.block_until_ready(bert_only_mlm_head(x2, params2, tm=16, tv=256))
    ref2 = _reference(x2, params2)
    assert out2.shape == (B2, S2, V2)
    assert jnp.allclose(out2, ref2, atol=1e-4, rtol=1e-4)

    print("KERNEL_OK")
</pallas_src>

<mosaic_0001>
module attributes {stable_mosaic.version = 11 : i64} {
  func.func @_mlm_head_kernel(%arg0: i32, %arg1: i32, %arg2: memref<16x128xf32, #tpu.memory_space<vmem>>, %arg3: memref<128x128xf32, #tpu.memory_space<vmem>>, %arg4: memref<1x128xf32, #tpu.memory_space<vmem>>, %arg5: memref<1x128xf32, #tpu.memory_space<vmem>>, %arg6: memref<1x128xf32, #tpu.memory_space<vmem>>, %arg7: memref<256x128xf32, #tpu.memory_space<vmem>>, %arg8: memref<16x256xf32, #tpu.memory_space<vmem>>, %arg9: memref<16x128xf32, #tpu.memory_space<vmem>>) attributes {dimension_semantics = [#tpu.dimension_semantics<parallel>, #tpu.dimension_semantics<arbitrary>], iteration_bounds = array<i64: 1, 1>, scalar_prefetch = 0 : i64, scratch_operands = 1 : i64, tpu.core_type = #tpu.core_type<tc>, window_params = [{transform_indices = @transform_0, window_bounds = array<i64: 16, 128>}, {pipeline_mode = #tpu.pipeline_mode<synchronous>, transform_indices = @transform_1, window_bounds = array<i64: 128, 128>}, {pipeline_mode = #tpu.pipeline_mode<synchronous>, transform_indices = @transform_2, window_bounds = array<i64: 1, 128>}, {pipeline_mode = #tpu.pipeline_mode<synchronous>, transform_indices = @transform_3, window_bounds = array<i64: 1, 128>}, {pipeline_mode = #tpu.pipeline_mode<synchronous>, transform_indices = @transform_4, window_bounds = array<i64: 1, 128>}, {transform_indices = @transform_5, window_bounds = array<i64: 256, 128>}, {transform_indices = @transform_6, window_bounds = array<i64: 16, 256>}]} {
    %c0_i32 = arith.constant 0 : i32
    %0 = arith.cmpi eq, %arg1, %c0_i32 : i32
    %1 = arith.extui %0 : i1 to i32
    %c0_i32_0 = arith.constant 0 : i32
    %2 = arith.cmpi ne, %1, %c0_i32_0 : i32
    scf.if %2 {
      %c0_6 = arith.constant 0 : index
      %c0_7 = arith.constant 0 : index
      %7 = vector.load %arg2[%c0_6, %c0_7] : memref<16x128xf32, #tpu.memory_space<vmem>>, vector<16x128xf32>
      %c0_8 = arith.constant 0 : index
      %c0_9 = arith.constant 0 : index
      %8 = vector.load %arg3[%c0_8, %c0_9] : memref<128x128xf32, #tpu.memory_space<vmem>>, vector<128x128xf32>
      %cst_10 = arith.constant dense<0.000000e+00> : vector<16x128xf32>
      %9 = tpu.matmul %7, %8, %cst_10 {dimension_numbers = #tpu.dot_dimension_numbers<[1], [1], [0], [0], [0, 0, 1, 0], [], []>} : vector<16x128xf32>, vector<128x128xf32>, vector<16x128xf32> -> vector<16x128xf32>
      %c0_11 = arith.constant 0 : index
      %c0_12 = arith.constant 0 : index
      %10 = vector.load %arg4[%c0_11, %c0_12] : memref<1x128xf32, #tpu.memory_space<vmem>>, vector<1x128xf32>
      %11 = vector.broadcast %10 : vector<1x128xf32> to vector<16x128xf32>
      %12 = arith.addf %9, %11 : vector<16x128xf32>
      %cst_13 = arith.constant 5.000000e-01 : f32
      %13 = vector.broadcast %cst_13 : f32 to vector<16x128xf32>
      %14 = arith.mulf %13, %12 : vector<16x128xf32>
      %cst_14 = arith.constant 0.707106769 : f32
      %15 = vector.broadcast %cst_14 : f32 to vector<16x128xf32>
      %16 = arith.mulf %12, %15 : vector<16x128xf32>
      %17 = math.erf %16 : vector<16x128xf32>
      %cst_15 = arith.constant 1.000000e+00 : f32
      %18 = vector.broadcast %cst_15 : f32 to vector<16x128xf32>
      %19 = arith.addf %18, %17 : vector<16x128xf32>
      %20 = arith.mulf %14, %19 : vector<16x128xf32>
      %cst_16 = arith.constant dense<0.000000e+00> : vector<16xf32>
      %21 = vector.multi_reduction <add>, %20, %cst_16 [1] : vector<16x128xf32> to vector<16xf32>
      %22 = vector.shape_cast %21 : vector<16xf32> to vector<16x1xf32>
      %cst_17 = arith.constant 1.280000e+02 : f32
      %23 = vector.broadcast %cst_17 : f32 to vector<16x1xf32>
      %24 = arith.divf %22, %23 : vector<16x1xf32>
      %25 = vector.broadcast %24 : vector<16x1xf32> to vector<16x128xf32>
      %26 = arith.subf %20, %25 : vector<16x128xf32>
      %27 = arith.mulf %26, %26 : vector<16x128xf32>
      %cst_18 = arith.constant dense<0.000000e+00> : vector<16xf32>
      %28 = vector.multi_reduction <add>, %27, %cst_18 [1] : vector<16x128xf32> to vector<16xf32>
      %29 = vector.shape_cast %28 : vector<16xf32> to vector<16x1xf32>
      %cst_19 = arith.constant 1.280000e+02 : f32
      %30 = vector.broadcast %cst_19 : f32 to vector<16x1xf32>
      %31 = arith.divf %29, %30 : vector<16x1xf32>
      %cst_20 = arith.constant 9.99999997E-7 : f32
      %32 = vector.broadcast %cst_20 : f32 to vector<16x1xf32>
      %33 = arith.addf %31, %32 : vector<16x1xf32>
      %34 = math.rsqrt %33 : vector<16x1xf32>
      %35 = vector.broadcast %34 : vector<16x1xf32> to vector<16x128xf32>
      %36 = arith.mulf %26, %35 : vector<16x128xf32>
      %c0_21 = arith.constant 0 : index
      %c0_22 = arith.constant 0 : index
      %37 = vector.load %arg5[%c0_21, %c0_22] : memref<1x128xf32, #tpu.memory_space<vmem>>, vector<1x128xf32>
      %38 = vector.broadcast %37 : vector<1x128xf32> to vector<16x128xf32>
      %39 = arith.mulf %36, %38 : vector<16x128xf32>
      %c0_23 = arith.constant 0 : index
      %c0_24 = arith.constant 0 : index
      %40 = vector.load %arg6[%c0_23, %c0_24] : memref<1x128xf32, #tpu.memory_space<vmem>>, vector<1x128xf32>
      %41 = vector.broadcast %40 : vector<1x128xf32> to vector<16x128xf32>
      %42 = arith.addf %39, %41 : vector<16x128xf32>
      %c0_25 = arith.constant 0 : index
      %c0_26 = arith.constant 0 : index
      %43 = vector.load %arg9[%c0_25, %c0_26] : memref<16x128xf32, #tpu.memory_space<vmem>>, vector<16x128xf32>
      tpu.vector_store %arg9[%c0_25, %c0_26], %42 {strides = array<i32>} : memref<16x128xf32, #tpu.memory_space<vmem>>, vector<16x128xf32>,
    } else {
    }
    %c0 = arith.constant 0 : index
    %c0_1 = arith.constant 0 : index
    %3 = vector.load %arg9[%c0, %c0_1] : memref<16x128xf32, #tpu.memory_space<vmem>>, vector<16x128xf32>
    %c0_2 = arith.constant 0 : index
    %c0_3 = arith.constant 0 : index
    %4 = vector.load %arg7[%c0_2, %c0_3] : memref<256x128xf32, #tpu.memory_space<vmem>>, vector<256x128xf32>
    %cst = arith.constant dense<0.000000e+00> : vector<16x256xf32>
    %5 = tpu.matmul %3, %4, %cst {dimension_numbers = #tpu.dot_dimension_numbers<[1], [1], [0], [0], [0, 0, 1, 0], [], []>} : vector<16x128xf32>, vector<256x128xf32>, vector<16x256xf32> -> vector<16x256xf32>
    %c0_4 = arith.constant 0 : index
    %c0_5 = arith.constant 0 : index
    %6 = vector.load %arg8[%c0_4, %c0_5] : memref<16x256xf32, #tpu.memory_space<vmem>>, vector<16x256xf32>
    tpu.vector_store %arg8[%c0_4, %c0_5], %5 {strides = array<i32>} : memref<16x256xf32, #tpu.memory_space<vmem>>, vector<16x256xf32>,
    return
  }
  func.func @transform_0(%arg0: i32, %arg1: i32) -> (i32, i32) {
    %c0_i32 = arith.constant 0 : i32
    %c0_i32_0 = arith.constant 0 : i32
    return %arg0, %c0_i32 : i32, i32
  }
  func.func @transform_1(%arg0: i32, %arg1: i32) -> (i32, i32) {
    %c0_i32 = arith.constant 0 : i32
    %c0_i32_0 = arith.constant 0 : i32
    %c0_i32_1 = arith.constant 0 : i32
    return %c0_i32, %c0_i32_0 : i32, i32
  }
  func.func @transform_2(%arg0: i32, %arg1: i32) -> (i32, i32) {
    %c0_i32 = arith.constant 0 : i32
    %c0_i32_0 = arith.constant 0 : i32
    %c0_i32_1 = arith.constant 0 : i32
    return %c0_i32, %c0_i32_0 : i32, i32
  }
  func.func @transform_3(%arg0: i32, %arg1: i32) -> (i32, i32) {
    %c0_i32 = arith.constant 0 : i32
    %c0_i32_0 = arith.constant 0 : i32
    %c0_i32_1 = arith.constant 0 : i32
    return %c0_i32, %c0_i32_0 : i32, i32
  }
  func.func @transform_4(%arg0: i32, %arg1: i32) -> (i32, i32) {
    %c0_i32 = arith.constant 0 : i32
    %c0_i32_0 = arith.constant 0 : i32
    %c0_i32_1 = arith.constant 0 : i32
    return %c0_i32, %c0_i32_0 : i32, i32
  }
  func.func @transform_5(%arg0: i32, %arg1: i32) -> (i32, i32) {
    %c0_i32 = arith.constant 0 : i32
    %c0_i32_0 = arith.constant 0 : i32
    return %arg1, %c0_i32 : i32, i32
  }
  func.func @transform_6(%arg0: i32, %arg1: i32) -> (i32, i32) {
    %c0_i32 = arith.constant 0 : i32
    return %arg0, %arg1 : i32, i32
  }
}

</mosaic_0001>

<llo_original>
// kernel: bert_only_mlm_head.1
$region0: #{bert_only_mlm_head.1}
  #allocation0 [shape = 'u32[]', space=smem, size = 0x4, offset = 0x4, fixed_abs, tag = 'smem constant byte address 0x4 - core index']
  #allocation1 [shape = 'u32[144,128]{1,0:T(1,128)}', space=vmem, size = 0x12000, scoped, tag = 'internal scratch']
  #allocation2 [shape = 'f32[16,128]{1,0:T(8,128)}', space=vmem, size = 0x2000, scoped, tag = 'scratch operand']
  %s0 = inlined_call_operand.hbm [shape: f32[16,128], index: 0, kind: input, shape index: {}]
  %s1 = inlined_call_operand.hbm [shape: f32[128,128], index: 1, kind: input, shape index: {}]
  %s2 = inlined_call_operand.vmem [shape: f32[1,128], index: 2, kind: input, shape index: {}]
  %s3 = inlined_call_operand.vmem [shape: f32[1,128], index: 3, kind: input, shape index: {}]
  %s4 = inlined_call_operand.vmem [shape: f32[1,128], index: 4, kind: input, shape index: {}]
  %s5 = inlined_call_operand.hbm [shape: f32[256,128], index: 5, kind: input, shape index: {}]
  %s6 = inlined_call_operand.hbm [shape: f32[16,256], index: 6, kind: output, shape index: {}]
  %s7 = sld [smem:[#allocation0]]
  $region50: #{bert_only_mlm_head.1} parent=0
    _
  %s9 = ssub.s32 1, %s7
  %s10 = scalar_select 0, %s9, %s7
  $region1: #{bert_only_mlm_head.1} parent=0
    #allocation3 [shape = 'u8[8192]{0}', space=vmem, size = 0x2000, scoped, tag = 'input window, operand 0, single buffered']
    #allocation4 [shape = 's32[1]{0}', space=sflag, size = 0x4, scoped, tag = 'scoped memory for bert_only_mlm_head.1']
    #allocation5 [shape = 's32[1]{0}', space=sflag, size = 0x4, scoped, tag = 'scoped memory for bert_only_mlm_head.1']
    #allocation6 [shape = 'u8[65536]{0}', space=vmem, size = 0x10000, scoped, tag = 'input window, operand 1, single buffered']
    #allocation7 [shape = 's32[1]{0}', space=sflag, size = 0x4, scoped, tag = 'scoped memory for bert_only_mlm_head.1']
    #allocation8 [shape = 'u8[131072]{0}', space=vmem, size = 0x20000, scoped, tag = 'input window, operand 5, single buffered']
    #allocation9 [shape = 'u8[16384]{0}', space=vmem, size = 0x4000, scoped, tag = 'output window, operand 0, single buffered']
    %11 = vsyncpa [#allocation4], 0
    %12 = vsyncpa [#allocation7], 0
    %13 = vsyncpa [#allocation5], 0
    // Predicated region
    $region2: #{bert_only_mlm_head.1} parent=1 // pred_check
      _
    $region3: #{bert_only_mlm_head.1} parent=1 // pred_check_branch
      %15 = sbr.rel (0) target = $region5
    $region4: #{bert_only_mlm_head.1} parent=1 // pred_region
      %s17 = ssub.s32 256, 256
      %18 = vsyncadd [#allocation4], %s17
      %s19 = sshll.u32 [#allocation3], 4
      %s20 = int_to_ptr.vmem [resolvable:$true] %s19
      %25 = dma.hbm_to_vmem [thread:$0]  %s0, 256, %s20, [#allocation4], 128, 128, 8
    $region5: #{bert_only_mlm_head.1} parent=1 // pred_fallthru
      _
    // Predicated region
    $region6: #{bert_only_mlm_head.1} parent=1 // pred_check
      _
    $region7: #{bert_only_mlm_head.1} parent=1 // pred_check_branch
      %27 = sbr.rel (0) target = $region9
    $region8: #{bert_only_mlm_head.1} parent=1 // pred_region
      %s29 = ssub.s32 2048, 2048
      %30 = vsyncadd [#allocation7], %s29
      %s31 = sshll.u32 [#allocation6], 4
      %s32 = int_to_ptr.vmem [resolvable:$true] %s31
      %37 = dma.hbm_to_vmem [thread:$0]  %s1, 2048, %s32, [#allocation7], 128, 128, 8
    $region9: #{bert_only_mlm_head.1} parent=1 // pred_fallthru
      _
    // Predicated region
    $region10: #{bert_only_mlm_head.1} parent=1 // pred_check
      _
    $region11: #{bert_only_mlm_head.1} parent=1 // pred_check_branch
      %39 = sbr.rel (0) target = $region13
    $region12: #{bert_only_mlm_head.1} parent=1 // pred_region
      _
    $region13: #{bert_only_mlm_head.1} parent=1 // pred_fallthru
      _
    // Predicated region
    $region14: #{bert_only_mlm_head.1} parent=1 // pred_check
      _
    $region15: #{bert_only_mlm_head.1} parent=1 // pred_check_branch
      %41 = sbr.rel (0) target = $region17
    $region16: #{bert_only_mlm_head.1} parent=1 // pred_region
      _
    $region17: #{bert_only_mlm_head.1} parent=1 // pred_fallthru
      _
    // Predicated region
    $region18: #{bert_only_mlm_head.1} parent=1 // pred_check
      _
    $region19: #{bert_only_mlm_head.1} parent=1 // pred_check_branch
      %43 = sbr.rel (0) target = $region21
    $region20: #{bert_only_mlm_head.1} parent=1 // pred_region
      _
    $region21: #{bert_only_mlm_head.1} parent=1 // pred_fallthru
      _
    // Predicated region
    $region22: #{bert_only_mlm_head.1} parent=1 // pred_check
      _
    $region23: #{bert_only_mlm_head.1} parent=1 // pred_check_branch
      %45 = sbr.rel (0) target = $region25
    $region24: #{bert_only_mlm_head.1} parent=1 // pred_region
      %s47 = ssub.s32 4096, 4096
      %48 = vsyncadd [#allocation7], %s47
      %s49 = sshll.u32 [#allocation8], 4
      %s50 = int_to_ptr.vmem [resolvable:$true] %s49
      %55 = dma.hbm_to_vmem [thread:$0]  %s5, 4096, %s50, [#allocation7], 128, 128, 8
    $region25: #{bert_only_mlm_head.1} parent=1 // pred_fallthru
      _
    // Predicated region
    $region26: #{bert_only_mlm_head.1} parent=1 // pred_check
      _
    $region27: #{bert_only_mlm_head.1} parent=1 // pred_check_branch
      %57 = sbr.rel (0) target = $region29
    $region28: #{bert_only_mlm_head.1} parent=1 // pred_region
      %58 = dma.done [#allocation4], 256
    $region29: #{bert_only_mlm_head.1} parent=1 // pred_fallthru
      _
    // Predicated region
    $region30: #{bert_only_mlm_head.1} parent=1 // pred_check
      _
    $region31: #{bert_only_mlm_head.1} parent=1 // pred_check_branch
      %60 = sbr.rel (0) target = $region33
    $region32: #{bert_only_mlm_head.1} parent=1 // pred_region
      %61 = dma.done [#allocation7], 2048
    $region33: #{bert_only_mlm_head.1} parent=1 // pred_fallthru
      _
    // Predicated region
    $region34: #{bert_only_mlm_head.1} parent=1 // pred_check
      _
    $region35: #{bert_only_mlm_head.1} parent=1 // pred_check_branch
      %63 = sbr.rel (0) target = $region37
    $region36: #{bert_only_mlm_head.1} parent=1 // pred_region
      %64 = dma.done [#allocation7], 4096
    $region37: #{bert_only_mlm_head.1} parent=1 // pred_fallthru
      _
    %p65 = scmp.eq.s32.totalorder 0, 0
    // Predicated region
    $region38: #{bert_only_mlm_head.1} parent=1 // pred_check
      %p66 = pneg %p65
    $region39: #{bert_only_mlm_head.1} parent=1 // pred_check_branch
      %68 = sbr.rel (%p66) target = $region41
    $region40: #{bert_only_mlm_head.1} parent=1 // pred_region
      %v69 = vld [vmem:[#allocation3] sm:$0xff]
      %v70 = vld [vmem:[#allocation3 + $0x8] sm:$0xff]
      %v71 = vld [vmem:[#allocation6] sm:$0xff]
      %v72 = vld [vmem:[#allocation6 + $0x8] sm:$0xff]
      %v73 = vld [vmem:[#allocation6 + $0x10] sm:$0xff]
      %v74 = vld [vmem:[#allocation6 + $0x18] sm:$0xff]
      %v75 = vld [vmem:[#allocation6 + $0x20] sm:$0xff]
      %v76 = vld [vmem:[#allocation6 + $0x28] sm:$0xff]
      %v77 = vld [vmem:[#allocation6 + $0x30] sm:$0xff]
      %v78 = vld [vmem:[#allocation6 + $0x38] sm:$0xff]
      %v79 = vld [vmem:[#allocation6 + $0x40] sm:$0xff]
      %v80 = vld [vmem:[#allocation6 + $0x48] sm:$0xff]
      %v81 = vld [vmem:[#allocation6 + $0x50] sm:$0xff]
      %v82 = vld [vmem:[#allocation6 + $0x58] sm:$0xff]
      %v83 = vld [vmem:[#allocation6 + $0x60] sm:$0xff]
      %v84 = vld [vmem:[#allocation6 + $0x68] sm:$0xff]
      %v85 = vld [vmem:[#allocation6 + $0x70] sm:$0xff]
      %v86 = vld [vmem:[#allocation6 + $0x78] sm:$0xff]
      %v87 = vld [vmem:[%s2] sm:$0x1]
      %v89 = vlaneseq
      %v90 = vshrl.u32 %v89, 7
      %v91 = vsub.s32 0, %v90
      %v92 = vrot.slane %v87, %v91
      %94 = vmatprep.subr.mxu0 0.0
      %95 = vmatpush1.xpose.msra.mxu0 %v71
      %96 = vmatprep.subr.mxu0 0.0
      %97 = vmatpush1.xpose.msra.mxu0 %v72
      %98 = vmatprep.subr.mxu0 0.0
      %99 = vmatpush1.xpose.msra.mxu0 %v73
      %100 = vmatprep.subr.mxu0 0.0
      %101 = vmatpush1.xpose.msra.mxu0 %v74
      %102 = vmatprep.subr.mxu0 0.0
      %103 = vmatpush1.xpose.msra.mxu0 %v75
      %104 = vmatprep.subr.mxu0 0.0
      %105 = vmatpush1.xpose.msra.mxu0 %v76
      %106 = vmatprep.subr.mxu0 0.0
      %107 = vmatpush1.xpose.msra.mxu0 %v77
      %108 = vmatprep.subr.mxu0 0.0
      %109 = vmatpush1.xpose.msra.mxu0 %v78
      %110 = vmatprep.subr.mxu0 0.0
      %111 = vmatpush1.xpose.msra.mxu0 %v79
      %112 = vmatprep.subr.mxu0 0.0
      %113 = vmatpush1.xpose.msra.mxu0 %v80
      %114 = vmatprep.subr.mxu0 0.0
      %115 = vmatpush1.xpose.msra.mxu0 %v81
      %116 = vmatprep.subr.mxu0 0.0
      %117 = vmatpush1.xpose.msra.mxu0 %v82
      %118 = vmatprep.subr.mxu0 0.0
      %119 = vmatpush1.xpose.msra.mxu0 %v83
      %120 = vmatprep.subr.mxu0 0.0
      %121 = vmatpush1.xpose.msra.mxu0 %v84
      %122 = vmatprep.subr.mxu0 0.0
      %123 = vmatpush1.xpose.msra.mxu0 %v85
      %124 = vmatprep.subr.mxu0 0.0
      %125 = vmatpush1.xpose.msra.mxu0 %v86
      %126 = vmatprep.subr.mxu0 0.0
      %127 = vmatpush1.xpose.msra.mxu0 0.0
      %128 = vmatprep.subr.mxu0 0.0
      %129 = vmatpush1.xpose.msra.mxu0 0.0
      %130 = vmatprep.subr.mxu0 0.0
      %131 = vmatpush1.xpose.msra.mxu0 0.0
      %132 = vmatprep.subr.mxu0 0.0
      %133 = vmatpush1.xpose.msra.mxu0 0.0
      %134 = vmatprep.subr.mxu0 0.0
      %135 = vmatpush1.xpose.msra.mxu0 0.0
      %136 = vmatprep.subr.mxu0 0.0
      %137 = vmatpush1.xpose.msra.mxu0 0.0
      %138 = vmatprep.subr.mxu0 0.0
      %139 = vmatpush1.xpose.msra.mxu0 0.0
      %140 = vmatprep.subr.mxu0 0.0
      %141 = vmatpush1.xpose.msra.mxu0 0.0
      %142 = vmatprep.subr.mxu0 0.0
      %143 = vmatpush1.xpose.msra.mxu0 0.0
      %144 = vmatprep.subr.mxu0 0.0
      %145 = vmatpush1.xpose.msra.mxu0 0.0
      %146 = vmatprep.subr.mxu0 0.0
      %147 = vmatpush1.xpose.msra.mxu0 0.0
      %148 = vmatprep.subr.mxu0 0.0
      %149 = vmatpush1.xpose.msra.mxu0 0.0
      %150 = vmatprep.subr.mxu0 0.0
      %151 = vmatpush1.xpose.msra.mxu0 0.0
      %152 = vmatprep.subr.mxu0 0.0
      %153 = vmatpush1.xpose.msra.mxu0 0.0
      %154 = vmatprep.subr.mxu0 0.0
      %155 = vmatpush1.xpose.msra.mxu0 0.0
      %156 = vmatprep.subr.mxu0 0.0
      %157 = vmatpush1.xpose.msra.mxu0 0.0
      %158 = vmatprep.mubr.f32.mxu0 0.0
      %159 = vmatmul.mubr.f32.gmra.mrb[0].mxu0 %v69
      %v160 = vpop.f32.mrb[0].mxu0
      %v161 = vadd.f32 %v92, %v160
      %v162 = vpop.f32.mrb[0].mxu0
      %163 = vmatprep.mubr.f32.mxu0 0.0
      %164 = vmatmul.mubr.f32.gmra.mrb[0].mxu0 %v70
      %v165 = vpop.f32.mrb[0].mxu0
      %v166 = vadd.f32 %v92, %v165
      %v167 = vpop.f32.mrb[0].mxu0
      %168 = vdwg.mxu0
      %v169 = vmul.f32 %v161, 0.5
      %v170 = vmul.f32 %v166, 0.5
      %v171 = vmul.f32 %v161, 0.70710677
      %v172 = vmul.f32 %v166, 0.70710677
      %v173 = verf.f32.pop %v171
      %v174 = verf.f32.pop %v172
      %v175 = vadd.f32 %v173, 1.0
      %v176 = vadd.f32 %v174, 1.0
      %v177 = vmul.f32 %v169, %v175
      %v178 = vmul.f32 %v170, %v176
      %179 = vadd.xlane.f32.xlu0 %v177
      %v180 = vpop.xlane.xlu0 %179
      %181 = vadd.xlane.f32.xlu0 %v178
      %v182 = vpop.xlane.xlu0 %181
      %v183 = vrcp.pop 128.0
      %v184 = vmul.f32 %v180, %v183
      %v185 = vmul.f32 %v182, %v183
      %v186 = vsub.f32 %v177, %v184
      %v187 = vsub.f32 %v178, %v185
      %v188 = vmul.f32 %v186, %v186
      %v189 = vmul.f32 %v187, %v187
      %190 = vadd.xlane.f32.xlu0 %v188
      %v191 = vpop.xlane.xlu0 %190
      %192 = vadd.xlane.f32.xlu0 %v189
      %v193 = vpop.xlane.xlu0 %192
      %v194 = vmul.f32 %v191, %v183
      %v195 = vmul.f32 %v193, %v183
      %v196 = vadd.f32 %v194, 1e-06
      %v197 = vadd.f32 %v195, 1e-06
      %v198 = vrsqrt.pop %v196
      %v199 = vrsqrt.pop %v197
      %v200 = vmul.f32 %v186, %v198
      %v201 = vmul.f32 %v187, %v199
      %v202 = vld [vmem:[%s3] sm:$0x1]
      %v204 = vlaneseq
      %v205 = vshrl.u32 %v204, 7
      %v206 = vsub.s32 0, %v205
      %v207 = vrot.slane %v202, %v206
      %v209 = vmul.f32 %v200, %v207
      %v210 = vmul.f32 %v201, %v207
      %v211 = vld [vmem:[%s4] sm:$0x1]
      %v213 = vlaneseq
      %v214 = vshrl.u32 %v213, 7
      %v215 = vsub.s32 0, %v214
      %v216 = vrot.slane %v211, %v215
      %v218 = vadd.f32 %v209, %v216
      %v219 = vadd.f32 %v210, %v216
      %220 = vst [vmem:[#allocation2] sm:$0xff] %v218
      %221 = vst [vmem:[#allocation2 + $0x8] sm:$0xff] %v219
    $region41: #{bert_only_mlm_head.1} parent=1 // pred_fallthru
      _
    %v222 = vld [vmem:[#allocation2] sm:$0xff]
    %v223 = vld [vmem:[#allocation2 + $0x8] sm:$0xff]
    %v224 = vld [vmem:[#allocation8] sm:$0xff]
    %v225 = vld [vmem:[#allocation8 + $0x8] sm:$0xff]
    %v226 = vld [vmem:[#allocation8 + $0x10] sm:$0xff]
    %v227 = vld [vmem:[#allocation8 + $0x18] sm:$0xff]
    %v228 = vld [vmem:[#allocation8 + $0x20] sm:$0xff]
    %v229 = vld [vmem:[#allocation8 + $0x28] sm:$0xff]
    %v230 = vld [vmem:[#allocation8 + $0x30] sm:$0xff]
    %v231 = vld [vmem:[#allocation8 + $0x38] sm:$0xff]
    %v232 = vld [vmem:[#allocation8 + $0x40] sm:$0xff]
    %v233 = vld [vmem:[#allocation8 + $0x48] sm:$0xff]
    %v234 = vld [vmem:[#allocation8 + $0x50] sm:$0xff]
    %v235 = vld [vmem:[#allocation8 + $0x58] sm:$0xff]
    %v236 = vld [vmem:[#allocation8 + $0x60] sm:$0xff]
    %v237 = vld [vmem:[#allocation8 + $0x68] sm:$0xff]
    %v238 = vld [vmem:[#allocation8 + $0x70] sm:$0xff]
    %v239 = vld [vmem:[#allocation8 + $0x78] sm:$0xff]
    %v240 = vld [vmem:[#allocation8 + $0x80] sm:$0xff]
    %v241 = vld [vmem:[#allocation8 + $0x88] sm:$0xff]
    %v242 = vld [vmem:[#allocation8 + $0x90] sm:$0xff]
    %v243 = vld [vmem:[#allocation8 + $0x98] sm:$0xff]
    %v244 = vld [vmem:[#allocation8 + $0xa0] sm:$0xff]
    %v245 = vld [vmem:[#allocation8 + $0xa8] sm:$0xff]
    %v246 = vld [vmem:[#allocation8 + $0xb0] sm:$0xff]
    %v247 = vld [vmem:[#allocation8 + $0xb8] sm:$0xff]
    %v248 = vld [vmem:[#allocation8 + $0xc0] sm:$0xff]
    %v249 = vld [vmem:[#allocation8 + $0xc8] sm:$0xff]
    %v250 = vld [vmem:[#allocation8 + $0xd0] sm:$0xff]
    %v251 = vld [vmem:[#allocation8 + $0xd8] sm:$0xff]
    %v252 = vld [vmem:[#allocation8 + $0xe0] sm:$0xff]
    %v253 = vld [vmem:[#allocation8 + $0xe8] sm:$0xff]
    %v254 = vld [vmem:[#allocation8 + $0xf0] sm:$0xff]
    %v255 = vld [vmem:[#allocation8 + $0xf8] sm:$0xff]
    %256 = vmatprep.subr.mxu0 0.0
    %257 = vmatpush1.xpose.msra.mxu0 %v224
    %258 = vmatprep.subr.mxu0 0.0
    %259 = vmatpush1.xpose.msra.mxu0 %v225
    %260 = vmatprep.subr.mxu0 0.0
    %261 = vmatpush1.xpose.msra.mxu0 %v226
    %262 = vmatprep.subr.mxu0 0.0
    %263 = vmatpush1.xpose.msra.mxu0 %v227
    %264 = vmatprep.subr.mxu0 0.0
    %265 = vmatpush1.xpose.msra.mxu0 %v228
    %266 = vmatprep.subr.mxu0 0.0
    %267 = vmatpush1.xpose.msra.mxu0 %v229
    %268 = vmatprep.subr.mxu0 0.0
    %269 = vmatpush1.xpose.msra.mxu0 %v230
    %270 = vmatprep.subr.mxu0 0.0
    %271 = vmatpush1.xpose.msra.mxu0 %v231
    %272 = vmatprep.subr.mxu0 0.0
    %273 = vmatpush1.xpose.msra.mxu0 %v232
    %274 = vmatprep.subr.mxu0 0.0
    %275 = vmatpush1.xpose.msra.mxu0 %v233
    %276 = vmatprep.subr.mxu0 0.0
    %277 = vmatpush1.xpose.msra.mxu0 %v234
    %278 = vmatprep.subr.mxu0 0.0
    %279 = vmatpush1.xpose.msra.mxu0 %v235
    %280 = vmatprep.subr.mxu0 0.0
    %281 = vmatpush1.xpose.msra.mxu0 %v236
    %282 = vmatprep.subr.mxu0 0.0
    %283 = vmatpush1.xpose.msra.mxu0 %v237
    %284 = vmatprep.subr.mxu0 0.0
    %285 = vmatpush1.xpose.msra.mxu0 %v238
    %286 = vmatprep.subr.mxu0 0.0
    %287 = vmatpush1.xpose.msra.mxu0 %v239
    %288 = vmatprep.subr.mxu0 0.0
    %289 = vmatpush1.xpose.msra.mxu0 %v240
    %290 = vmatprep.subr.mxu0 0.0
    %291 = vmatpush1.xpose.msra.mxu0 %v241
    %292 = vmatprep.subr.mxu0 0.0
    %293 = vmatpush1.xpose.msra.mxu0 %v242
    %294 = vmatprep.subr.mxu0 0.0
    %295 = vmatpush1.xpose.msra.mxu0 %v243
    %296 = vmatprep.subr.mxu0 0.0
    %297 = vmatpush1.xpose.msra.mxu0 %v244
    %298 = vmatprep.subr.mxu0 0.0
    %299 = vmatpush1.xpose.msra.mxu0 %v245
    %300 = vmatprep.subr.mxu0 0.0
    %301 = vmatpush1.xpose.msra.mxu0 %v246
    %302 = vmatprep.subr.mxu0 0.0
    %303 = vmatpush1.xpose.msra.mxu0 %v247
    %304 = vmatprep.subr.mxu0 0.0
    %305 = vmatpush1.xpose.msra.mxu0 %v248
    %306 = vmatprep.subr.mxu0 0.0
    %307 = vmatpush1.xpose.msra.mxu0 %v249
    %308 = vmatprep.subr.mxu0 0.0
    %309 = vmatpush1.xpose.msra.mxu0 %v250
    %310 = vmatprep.subr.mxu0 0.0
    %311 = vmatpush1.xpose.msra.mxu0 %v251
    %312 = vmatprep.subr.mxu0 0.0
    %313 = vmatpush1.xpose.msra.mxu0 %v252
    %314 = vmatprep.subr.mxu0 0.0
    %315 = vmatpush1.xpose.msra.mxu0 %v253
    %316 = vmatprep.subr.mxu0 0.0
    %317 = vmatpush1.xpose.msra.mxu0 %v254
    %318 = vmatprep.subr.mxu0 0.0
    %319 = vmatpush1.xpose.msra.mxu0 %v255
    %320 = vmatprep.mubr.f32.mxu0 0.0
    %321 = vmatmul.mubr.f32.gmra.mrb[0].mxu0 %v222
    %v322 = vpop.f32.mrb[0].mxu0
    %v323 = vadd.f32 0.0, %v322
    %v324 = vpop.f32.mrb[0].mxu0
    %v325 = vadd.f32 0.0, %v324
    %326 = vmatprep.mubr.f32.mxu0 0.0
    %327 = vmatmul.mubr.f32.gmra.mrb[0].mxu0 %v223
    %v328 = vpop.f32.mrb[0].mxu0
    %v329 = vadd.f32 0.0, %v328
    %v330 = vpop.f32.mrb[0].mxu0
    %v331 = vadd.f32 0.0, %v330
    %332 = vdwg.mxu0
    %333 = vst [vmem:[#allocation9] sm:$0xff] %v323
    %334 = vst [vmem:[#allocation9 + $0x8] sm:$0xff] %v325
    %335 = vst [vmem:[#allocation9 + $0x10] sm:$0xff] %v329
    %336 = vst [vmem:[#allocation9 + $0x18] sm:$0xff] %v331
    // Predicated region
    $region42: #{bert_only_mlm_head.1} parent=1 // pred_check
      _
    $region43: #{bert_only_mlm_head.1} parent=1 // pred_check_branch
      %338 = sbr.rel (0) target = $region45
    $region44: #{bert_only_mlm_head.1} parent=1 // pred_region
      %s340 = ssub.s32 512, 512
      %341 = vsyncadd [#allocation5], %s340
      %s342 = sshll.u32 [#allocation9], 4
      %s343 = int_to_ptr.vmem [resolvable:$true] %s342
      %348 = dma.vmem_to_hbm [thread:$0]  %s343, 512, %s6, [#allocation5], 256, 256, 16
    $region45: #{bert_only_mlm_head.1} parent=1 // pred_fallthru
      _
    // Predicated region
    $region46: #{bert_only_mlm_head.1} parent=1 // pred_check
      _
    $region47: #{bert_only_mlm_head.1} parent=1 // pred_check_branch
      %350 = sbr.rel (0) target = $region49
    $region48: #{bert_only_mlm_head.1} parent=1 // pred_region
      %351 = dma.done [#allocation5], 512
    $region49: #{bert_only_mlm_head.1} parent=1 // pred_fallthru
      _
    %352 = vsyncpa [#allocation4], 1
    %353 = vsyncpa [#allocation7], 1
    %354 = vsyncpa [#allocation5], 1

</llo_original>
